<compile_context>
chip_gen: v6e
topology: v6e:2x2x1
jax: 0.10.0
libtpu: 0.0.40
codegen_flags: <defaults>
</compile_context>

<pallas_src>
import jax
import jax.numpy as jnp
from jax.experimental import pallas as pl
from jax.experimental.pallas import tpu as pltpu


def dw_bn_relu_kernel(x_ref, top_ref, bot_ref, p_ref, o_ref):
    # x_ref:   (TH, W, Cp)  strip of rows (input dtype)
    # top_ref: (1,  W, Cp)  row above the strip (zeros at the image border)
    # bot_ref: (1,  W, Cp)  row below the strip (zeros at the image border)
    # p_ref:   (10, Cp)     rows 0..8 = folded depthwise taps, row 9 = shift
    TH, W, _ = x_ref.shape

    # Extended strip kept in the *input* dtype (no upcast of big temporaries).
    x_ext = jnp.concatenate([top_ref[...], x_ref[...], bot_ref[...]], axis=0)

    # W-shifted copies via sublane rotation (XLU) + zero at the image W-border.
    w_idx = jax.lax.broadcasted_iota(jnp.int32, (1, W, 1), 1)
    x_l = jnp.where(w_idx >= 1, pltpu.roll(x_ext, 1, axis=1), 0.0)          # x[.., w-1, :]
    x_r = jnp.where(w_idx <= W - 2, pltpu.roll(x_ext, W - 1, axis=1), 0.0)  # x[.., w+1, :]
    cols = (x_l, x_ext, x_r)                                   # kx = 0, 1, 2

    pv = p_ref[...]                                            # (10, Cp) f32, read once

    acc = None
    for ky in range(3):                                        # dy = ky - 1
        for kx in range(3):
            # f32 only at the MAC; for f32 inputs the astype is a no-op.
            term = cols[kx][ky:ky + TH].astype(jnp.float32) * pv[ky * 3 + kx]
            acc = term if acc is None else acc + term

    o_ref[...] = jnp.maximum(acc + pv[9], 0.0).astype(o_ref.dtype)


def _vmem_capacity_bytes():
    try:
        return int(pltpu.get_tpu_info().vmem_capacity_bytes)
    except Exception:
        return 64 * 1024 * 1024        # conservative fallback (v7x per-TC VMEM)


def _pick_strips(B, H, W, Cp, in_bytes, out_bytes, vmem_cap):
    """Pick (strip height TH, strip count nH) from a per-step footprint model."""
    # ~24 MiB working set on 64 MiB parts, ~48 MiB on 128 MiB parts.
    budget = min(max(vmem_cap * 3 // 8, 24 * 1024 * 1024), 48 * 1024 * 1024)
    # Per row: 2x double-buffered input + 2x double-buffered output (native
    # dtype) + 3 native temporaries (x_ext, x_l, x_r) + f32 acc + one f32 term.
    per_row = W * Cp * (5 * in_bytes + 2 * out_bytes + 8)
    th = budget // max(per_row, 1) - 2
    th = max(min(H, 8), min(H, th))        # never degenerate to 1-row strips
    nH = -(-H // th)
    # Ensure >= 4 grid steps when H allows: keeps both v7x TensorCores busy
    # and gives the pipeline something to overlap even at batch 1.
    if B * nH < 4 and H > 8:
        nH = max(nH, min(-(-H // 8), -(-4 // B)))
    th = -(-H // nH)
    nH = -(-H // th)
    return int(th), int(nH)


def dw_bn_relu(x, H, W, weight, bias, gamma, beta, running_mean, running_var,
               eps=1e-5, strip_rows=None):
    """x: (B, N, C) with N == H*W.  weight: (C, 1, 3, 3).  Returns (B, N, C)."""
    B, N, C = x.shape
    assert N == H * W

    LANE = 128
    Cp = -(-C // LANE) * LANE

    # Fold conv bias + BatchNorm (eval mode) into the taps and one shift:
    #   relu((conv(x,w)+b - mu)*g/sqrt(v+eps) + beta)
    #     = relu(conv(x, w*s) + (b - mu)*s + beta),   s = g/sqrt(v+eps)
    w9 = jnp.transpose(weight.reshape(C, 9), (1, 0)).astype(jnp.float32)   # (9, C)
    scale = (gamma / jnp.sqrt(running_var + eps)).astype(jnp.float32)
    shift = ((bias - running_mean) * scale + beta).astype(jnp.float32)
    params = jnp.concatenate([w9 * scale[None, :], shift[None, :]], axis=0)  # (10, C)
    if Cp > C:
        params = jnp.pad(params, ((0, 0), (0, Cp - C)))                      # (10, Cp)

    in_bytes = jnp.dtype(x.dtype).itemsize
    vmem_cap = _vmem_capacity_bytes()
    if strip_rows is None:
        TH, nH = _pick_strips(B, H, W, Cp, in_bytes, in_bytes, vmem_cap)
    else:
        TH = int(max(1, min(strip_rows, H)))
        nH = -(-H // TH)
    Hp = nH * TH

    # Lane-dense, strip-padded NHWC input: ONE fused pad, skipped entirely
    # when the layout is already aligned (then x_p is just a reshape view).
    x_nhwc = x.reshape(B, H, W, C)
    if Hp > H or Cp > C:
        x_p = jnp.pad(x_nhwc, ((0, 0), (0, Hp - H), (0, 0), (0, Cp - C)))    # (B, Hp, W, Cp)
    else:
        x_p = x_nhwc

    # 1-row halos per strip gathered from x_p itself (tiny: nH rows each).
    zrow = jnp.zeros((B, 1, W, Cp), x.dtype)
    halo_top = jnp.concatenate([zrow, x_p[:, TH - 1:Hp - 1:TH]], axis=1)     # (B, nH, W, Cp)
    halo_bot = jnp.concatenate([x_p[:, TH:Hp:TH], zrow], axis=1)             # (B, nH, W, Cp)

    vmem_limit = max(32 * 1024 * 1024,
                     min(vmem_cap * 3 // 4, 64 * 1024 * 1024))

    out_p = pl.pallas_call(
        dw_bn_relu_kernel,
        out_shape=jax.ShapeDtypeStruct((B, Hp, W, Cp), x.dtype),
        grid=(B, nH),
        in_specs=[
            pl.BlockSpec((None, TH, W, Cp), lambda b, s: (b, s, 0, 0)),      # strip
            pl.BlockSpec((None, 1, W, Cp), lambda b, s: (b, s, 0, 0)),       # halo above
            pl.BlockSpec((None, 1, W, Cp), lambda b, s: (b, s, 0, 0)),       # halo below
            pl.BlockSpec((10, Cp), lambda b, s: (0, 0)),                     # folded params
        ],
        out_specs=pl.BlockSpec((None, TH, W, Cp), lambda b, s: (b, s, 0, 0)),
        compiler_params=pltpu.CompilerParams(
            dimension_semantics=("parallel", "parallel"),
            vmem_limit_bytes=int(vmem_limit)),
    )(x_p, halo_top, halo_bot, params)

    if Hp > H or Cp > C:
        out_p = out_p[:, :H, :, :C]
    return out_p.reshape(B, H * W, C)


def dw_bn_relu_reference(x, H, W, weight, bias, gamma, beta, rm, rv, eps=1e-5):
    """Pure-JAX NCHW reference mirroring the PyTorch forward (eval-mode BN)."""
    B, N, C = x.shape
    xc = jnp.transpose(x, (0, 2, 1)).reshape(B, C, H, W).astype(jnp.float32)
    y = jax.lax.conv_general_dilated(
        xc, weight, window_strides=(1, 1), padding=((1, 1), (1, 1)),
        dimension_numbers=("NCHW", "OIHW", "NCHW"),
        feature_group_count=C)
    y = y + bias.reshape(1, C, 1, 1)
    y = (y - rm.reshape(1, C, 1, 1)) / jnp.sqrt(rv.reshape(1, C, 1, 1) + eps)
    y = y * gamma.reshape(1, C, 1, 1) + beta.reshape(1, C, 1, 1)
    y = jnp.maximum(y, 0.0)
    return jnp.transpose(y.reshape(B, C, H * W), (0, 2, 1))


if __name__ == "__main__":
    def _make_case(key, B, C, H, W):
        N = H * W
        kx_, kw_, kb_, kg_, kbe_, krm_, krv_ = jax.random.split(key, 7)
        x = jax.random.normal(kx_, (B, N, C), dtype=jnp.float32)
        weight = jax.random.normal(kw_, (C, 1, 3, 3), dtype=jnp.float32) * 0.2
        bias = jax.random.normal(kb_, (C,), dtype=jnp.float32) * 0.1
        gamma = 1.0 + 0.1 * jax.random.normal(kg_, (C,), dtype=jnp.float32)
        beta = 0.1 * jax.random.normal(kbe_, (C,), dtype=jnp.float32)
        rm = 0.1 * jax.random.normal(krm_, (C,), dtype=jnp.float32)
        rv = 0.5 + jnp.abs(jax.random.normal(krv_, (C,), dtype=jnp.float32))
        return x, weight, bias, gamma, beta, rm, rv

    def _run_case(key, B, C, H, W, strip_rows=None):
        x, weight, bias, gamma, beta, rm, rv = _make_case(key, B, C, H, W)
        out = dw_bn_relu(x, H, W, weight, bias, gamma, beta, rm, rv,
                         strip_rows=strip_rows)
        out = jax.block_until_ready(out)
        ref = dw_bn_relu_reference(x, H, W, weight, bias, gamma, beta, rm, rv)
        assert out.shape == (B, H * W, C)
        err = jnp.max(jnp.abs(out - ref))
        assert jnp.allclose(out, ref, atol=1e-4, rtol=1e-4), f"max abs err {err}"

    k0, k1, k2 = jax.random.split(jax.random.PRNGKey(0), 3)

    # single-strip path (full image per grid step), lane padding exercised
    _run_case(k0, B=2, C=4, H=8, W=8)
    # multi-strip path: halo rows exercised, H not divisible by strip height
    _run_case(k1, B=1, C=4, H=13, W=8, strip_rows=4)

    # bf16 activation path: temporaries stay bf16, accumulation in f32
    x, weight, bias, gamma, beta, rm, rv = _make_case(k2, B=2, C=4, H=16, W=8)
    x_bf = x.astype(jnp.bfloat16)
    out_bf = jax.block_until_ready(
        dw_bn_relu(x_bf, 16, 8, weight, bias, gamma, beta, rm, rv, strip_rows=8))
    ref_bf = dw_bn_relu_reference(x_bf.astype(jnp.float32), 16, 8,
                                  weight, bias, gamma, beta, rm, rv)
    assert out_bf.shape == x.shape
    assert jnp.allclose(out_bf.astype(jnp.float32), ref_bf, atol=1e-1, rtol=1e-1)

    print("KERNEL_OK")
</pallas_src>

<mosaic_0001>
module attributes {stable_mosaic.version = 11 : i64} {
  func.func @dw_bn_relu_kernel(%arg0: i32, %arg1: i32, %arg2: memref<1x8x8x128xf32, #tpu.memory_space<vmem>>, %arg3: memref<1x1x8x128xf32, #tpu.memory_space<vmem>>, %arg4: memref<1x1x8x128xf32, #tpu.memory_space<vmem>>, %arg5: memref<10x128xf32, #tpu.memory_space<vmem>>, %arg6: memref<1x8x8x128xf32, #tpu.memory_space<vmem>>) attributes {dimension_semantics = [#tpu.dimension_semantics<parallel>, #tpu.dimension_semantics<parallel>], iteration_bounds = array<i64: 2, 1>, scalar_prefetch = 0 : i64, scratch_operands = 0 : i64, tpu.core_type = #tpu.core_type<tc>, window_params = [{transform_indices = @transform_0, window_bounds = array<i64: 1, 8, 8, 128>}, {transform_indices = @transform_1, window_bounds = array<i64: 1, 1, 8, 128>}, {transform_indices = @transform_2, window_bounds = array<i64: 1, 1, 8, 128>}, {pipeline_mode = #tpu.pipeline_mode<synchronous>, transform_indices = @transform_3, window_bounds = array<i64: 10, 128>}, {transform_indices = @transform_4, window_bounds = array<i64: 1, 8, 8, 128>}]} {
    %c0 = arith.constant 0 : index
    %c0_0 = arith.constant 0 : index
    %c0_1 = arith.constant 0 : index
    %c0_2 = arith.constant 0 : index
    %0 = vector.load %arg3[%c0, %c0_0, %c0_1, %c0_2] : memref<1x1x8x128xf32, #tpu.memory_space<vmem>>, vector<1x1x8x128xf32>
    %1 = vector.shape_cast %0 : vector<1x1x8x128xf32> to vector<1x8x128xf32>
    %c0_3 = arith.constant 0 : index
    %c0_4 = arith.constant 0 : index
    %c0_5 = arith.constant 0 : index
    %c0_6 = arith.constant 0 : index
    %2 = vector.load %arg2[%c0_3, %c0_4, %c0_5, %c0_6] : memref<1x8x8x128xf32, #tpu.memory_space<vmem>>, vector<1x8x8x128xf32>
    %3 = vector.shape_cast %2 : vector<1x8x8x128xf32> to vector<8x8x128xf32>
    %c0_7 = arith.constant 0 : index
    %c0_8 = arith.constant 0 : index
    %c0_9 = arith.constant 0 : index
    %c0_10 = arith.constant 0 : index
    %4 = vector.load %arg4[%c0_7, %c0_8, %c0_9, %c0_10] : memref<1x1x8x128xf32, #tpu.memory_space<vmem>>, vector<1x1x8x128xf32>
    %5 = vector.shape_cast %4 : vector<1x1x8x128xf32> to vector<1x8x128xf32>
    %6 = tpu.concatenate %1, %3, %5 in 0 : vector<1x8x128xf32>, vector<8x8x128xf32>, vector<1x8x128xf32> -> vector<10x8x128xf32>
    %7 = tpu.iota {dimensions = array<i32: 1>} : vector<1x8x1xi32>
    %c1_i32 = arith.constant 1 : i32
    %8 = vector.broadcast %c1_i32 : i32 to vector<1x8x1xi32>
    %9 = arith.cmpi sge, %7, %8 : vector<1x8x1xi32>
    %c1_i32_11 = arith.constant 1 : i32
    %10 = tpu.dynamic_rotate %6 by %c1_i32_11 dim 1 : vector<10x8x128xf32>, i32 -> vector<10x8x128xf32>
    %cst = arith.constant 0.000000e+00 : f32
    %11 = vector.shape_cast %9 : vector<1x8x1xi1> to vector<1x8x1xi1>
    %12 = vector.broadcast %11 : vector<1x8x1xi1> to vector<10x8x128xi1>
    %13 = vector.broadcast %cst : f32 to vector<10x8x128xf32>
    %14 = arith.select %12, %10, %13 : vector<10x8x128xi1>, vector<10x8x128xf32>
    %c6_i32 = arith.constant 6 : i32
    %15 = vector.broadcast %c6_i32 : i32 to vector<1x8x1xi32>
    %16 = arith.cmpi sle, %7, %15 : vector<1x8x1xi32>
    %c7_i32 = arith.constant 7 : i32
    %17 = tpu.dynamic_rotate %6 by %c7_i32 dim 1 : vector<10x8x128xf32>, i32 -> vector<10x8x128xf32>
    %cst_12 = arith.constant 0.000000e+00 : f32
    %18 = vector.shape_cast %16 : vector<1x8x1xi1> to vector<1x8x1xi1>
    %19 = vector.broadcast %18 : vector<1x8x1xi1> to vector<10x8x128xi1>
    %20 = vector.broadcast %cst_12 : f32 to vector<10x8x128xf32>
    %21 = arith.select %19, %17, %20 : vector<10x8x128xi1>, vector<10x8x128xf32>
    %c0_13 = arith.constant 0 : index
    %c0_14 = arith.constant 0 : index
    %22 = vector.load %arg5[%c0_13, %c0_14] : memref<10x128xf32, #tpu.memory_space<vmem>>, vector<10x128xf32>
    %23 = vector.extract_strided_slice %14 {offsets = [0, 0, 0], sizes = [8, 8, 128], strides = [1, 1, 1]} : vector<10x8x128xf32> to vector<8x8x128xf32>
    %24 = vector.extract_strided_slice %22 {offsets = [0, 0], sizes = [1, 128], strides = [1, 1]} : vector<10x128xf32> to vector<1x128xf32>
    %25 = vector.shape_cast %24 : vector<1x128xf32> to vector<128xf32>
    %26 = vector.shape_cast %25 : vector<128xf32> to vector<1x1x128xf32>
    %27 = vector.broadcast %26 : vector<1x1x128xf32> to vector<8x8x128xf32>
    %28 = arith.mulf %23, %27 : vector<8x8x128xf32>
    %29 = vector.extract_strided_slice %6 {offsets = [0, 0, 0], sizes = [8, 8, 128], strides = [1, 1, 1]} : vector<10x8x128xf32> to vector<8x8x128xf32>
    %30 = vector.extract_strided_slice %22 {offsets = [1, 0], sizes = [1, 128], strides = [1, 1]} : vector<10x128xf32> to vector<1x128xf32>
    %31 = vector.shape_cast %30 : vector<1x128xf32> to vector<128xf32>
    %32 = vector.shape_cast %31 : vector<128xf32> to vector<1x1x128xf32>
    %33 = vector.broadcast %32 : vector<1x1x128xf32> to vector<8x8x128xf32>
    %34 = arith.mulf %29, %33 : vector<8x8x128xf32>
    %35 = arith.addf %28, %34 : vector<8x8x128xf32>
    %36 = vector.extract_strided_slice %21 {offsets = [0, 0, 0], sizes = [8, 8, 128], strides = [1, 1, 1]} : vector<10x8x128xf32> to vector<8x8x128xf32>
    %37 = vector.extract_strided_slice %22 {offsets = [2, 0], sizes = [1, 128], strides = [1, 1]} : vector<10x128xf32> to vector<1x128xf32>
    %38 = vector.shape_cast %37 : vector<1x128xf32> to vector<128xf32>
    %39 = vector.shape_cast %38 : vector<128xf32> to vector<1x1x128xf32>
    %40 = vector.broadcast %39 : vector<1x1x128xf32> to vector<8x8x128xf32>
    %41 = arith.mulf %36, %40 : vector<8x8x128xf32>
    %42 = arith.addf %35, %41 : vector<8x8x128xf32>
    %43 = vector.extract_strided_slice %14 {offsets = [1, 0, 0], sizes = [8, 8, 128], strides = [1, 1, 1]} : vector<10x8x128xf32> to vector<8x8x128xf32>
    %44 = vector.extract_strided_slice %22 {offsets = [3, 0], sizes = [1, 128], strides = [1, 1]} : vector<10x128xf32> to vector<1x128xf32>
    %45 = vector.shape_cast %44 : vector<1x128xf32> to vector<128xf32>
    %46 = vector.shape_cast %45 : vector<128xf32> to vector<1x1x128xf32>
    %47 = vector.broadcast %46 : vector<1x1x128xf32> to vector<8x8x128xf32>
    %48 = arith.mulf %43, %47 : vector<8x8x128xf32>
    %49 = arith.addf %42, %48 : vector<8x8x128xf32>
    %50 = vector.extract_strided_slice %6 {offsets = [1, 0, 0], sizes = [8, 8, 128], strides = [1, 1, 1]} : vector<10x8x128xf32> to vector<8x8x128xf32>
    %51 = vector.extract_strided_slice %22 {offsets = [4, 0], sizes = [1, 128], strides = [1, 1]} : vector<10x128xf32> to vector<1x128xf32>
    %52 = vector.shape_cast %51 : vector<1x128xf32> to vector<128xf32>
    %53 = vector.shape_cast %52 : vector<128xf32> to vector<1x1x128xf32>
    %54 = vector.broadcast %53 : vector<1x1x128xf32> to vector<8x8x128xf32>
    %55 = arith.mulf %50, %54 : vector<8x8x128xf32>
    %56 = arith.addf %49, %55 : vector<8x8x128xf32>
    %57 = vector.extract_strided_slice %21 {offsets = [1, 0, 0], sizes = [8, 8, 128], strides = [1, 1, 1]} : vector<10x8x128xf32> to vector<8x8x128xf32>
    %58 = vector.extract_strided_slice %22 {offsets = [5, 0], sizes = [1, 128], strides = [1, 1]} : vector<10x128xf32> to vector<1x128xf32>
    %59 = vector.shape_cast %58 : vector<1x128xf32> to vector<128xf32>
    %60 = vector.shape_cast %59 : vector<128xf32> to vector<1x1x128xf32>
    %61 = vector.broadcast %60 : vector<1x1x128xf32> to vector<8x8x128xf32>
    %62 = arith.mulf %57, %61 : vector<8x8x128xf32>
    %63 = arith.addf %56, %62 : vector<8x8x128xf32>
    %64 = vector.extract_strided_slice %14 {offsets = [2, 0, 0], sizes = [8, 8, 128], strides = [1, 1, 1]} : vector<10x8x128xf32> to vector<8x8x128xf32>
    %65 = vector.extract_strided_slice %22 {offsets = [6, 0], sizes = [1, 128], strides = [1, 1]} : vector<10x128xf32> to vector<1x128xf32>
    %66 = vector.shape_cast %65 : vector<1x128xf32> to vector<128xf32>
    %67 = vector.shape_cast %66 : vector<128xf32> to vector<1x1x128xf32>
    %68 = vector.broadcast %67 : vector<1x1x128xf32> to vector<8x8x128xf32>
    %69 = arith.mulf %64, %68 : vector<8x8x128xf32>
    %70 = arith.addf %63, %69 : vector<8x8x128xf32>
    %71 = vector.extract_strided_slice %6 {offsets = [2, 0, 0], sizes = [8, 8, 128], strides = [1, 1, 1]} : vector<10x8x128xf32> to vector<8x8x128xf32>
    %72 = vector.extract_strided_slice %22 {offsets = [7, 0], sizes = [1, 128], strides = [1, 1]} : vector<10x128xf32> to vector<1x128xf32>
    %73 = vector.shape_cast %72 : vector<1x128xf32> to vector<128xf32>
    %74 = vector.shape_cast %73 : vector<128xf32> to vector<1x1x128xf32>
    %75 = vector.broadcast %74 : vector<1x1x128xf32> to vector<8x8x128xf32>
    %76 = arith.mulf %71, %75 : vector<8x8x128xf32>
    %77 = arith.addf %70, %76 : vector<8x8x128xf32>
    %78 = vector.extract_strided_slice %21 {offsets = [2, 0, 0], sizes = [8, 8, 128], strides = [1, 1, 1]} : vector<10x8x128xf32> to vector<8x8x128xf32>
    %79 = vector.extract_strided_slice %22 {offsets = [8, 0], sizes = [1, 128], strides = [1, 1]} : vector<10x128xf32> to vector<1x128xf32>
    %80 = vector.shape_cast %79 : vector<1x128xf32> to vector<128xf32>
    %81 = vector.shape_cast %80 : vector<128xf32> to vector<1x1x128xf32>
    %82 = vector.broadcast %81 : vector<1x1x128xf32> to vector<8x8x128xf32>
    %83 = arith.mulf %78, %82 : vector<8x8x128xf32>
    %84 = arith.addf %77, %83 : vector<8x8x128xf32>
    %85 = vector.extract_strided_slice %22 {offsets = [9, 0], sizes = [1, 128], strides = [1, 1]} : vector<10x128xf32> to vector<1x128xf32>
    %86 = vector.shape_cast %85 : vector<1x128xf32> to vector<128xf32>
    %87 = vector.shape_cast %86 : vector<128xf32> to vector<1x1x128xf32>
    %88 = vector.broadcast %87 : vector<1x1x128xf32> to vector<8x8x128xf32>
    %89 = arith.addf %84, %88 : vector<8x8x128xf32>
    %cst_15 = arith.constant 0.000000e+00 : f32
    %90 = vector.broadcast %cst_15 : f32 to vector<8x8x128xf32>
    %91 = arith.maximumf %89, %90 : vector<8x8x128xf32>
    %c0_16 = arith.constant 0 : index
    %c0_17 = arith.constant 0 : index
    %c0_18 = arith.constant 0 : index
    %c0_19 = arith.constant 0 : index
    %92 = vector.load %arg6[%c0_16, %c0_17, %c0_18, %c0_19] : memref<1x8x8x128xf32, #tpu.memory_space<vmem>>, vector<1x8x8x128xf32>
    %93 = vector.shape_cast %92 : vector<1x8x8x128xf32> to vector<8x8x128xf32>
    %94 = vector.shape_cast %91 : vector<8x8x128xf32> to vector<1x8x8x128xf32>
    tpu.vector_store %arg6[%c0_16, %c0_17, %c0_18, %c0_19], %94 {strides = array<i32>} : memref<1x8x8x128xf32, #tpu.memory_space<vmem>>, vector<1x8x8x128xf32>,
    return
  }
  func.func @transform_0(%arg0: i32, %arg1: i32) -> (i32, i32, i32, i32) {
    %c0_i32 = arith.constant 0 : i32
    %c0_i32_0 = arith.constant 0 : i32
    %c0_i32_1 = arith.constant 0 : i32
    return %arg0, %arg1, %c0_i32, %c0_i32_0 : i32, i32, i32, i32
  }
  func.func @transform_1(%arg0: i32, %arg1: i32) -> (i32, i32, i32, i32) {
    %c0_i32 = arith.constant 0 : i32
    %c0_i32_0 = arith.constant 0 : i32
    %c0_i32_1 = arith.constant 0 : i32
    return %arg0, %arg1, %c0_i32, %c0_i32_0 : i32, i32, i32, i32
  }
  func.func @transform_2(%arg0: i32, %arg1: i32) -> (i32, i32, i32, i32) {
    %c0_i32 = arith.constant 0 : i32
    %c0_i32_0 = arith.constant 0 : i32
    %c0_i32_1 = arith.constant 0 : i32
    return %arg0, %arg1, %c0_i32, %c0_i32_0 : i32, i32, i32, i32
  }
  func.func @transform_3(%arg0: i32, %arg1: i32) -> (i32, i32) {
    %c0_i32 = arith.constant 0 : i32
    %c0_i32_0 = arith.constant 0 : i32
    %c0_i32_1 = arith.constant 0 : i32
    return %c0_i32, %c0_i32_0 : i32, i32
  }
  func.func @transform_4(%arg0: i32, %arg1: i32) -> (i32, i32, i32, i32) {
    %c0_i32 = arith.constant 0 : i32
    %c0_i32_0 = arith.constant 0 : i32
    %c0_i32_1 = arith.constant 0 : i32
    return %arg0, %arg1, %c0_i32, %c0_i32_0 : i32, i32, i32, i32
  }
}

</mosaic_0001>

<llo_original>
// kernel: tpu_custom_call.1
$region0: #{tpu_custom_call.1}
  #allocation0 [shape = 'u32[]', space=smem, size = 0x4, offset = 0x4, fixed_abs, tag = 'smem constant byte address 0x4 - core index']
  #allocation1 [shape = 'u32[144,128]{1,0:T(1,128)}', space=vmem, size = 0x12000, scoped, tag = 'internal scratch']
  %s0 = inlined_call_operand.hbm [shape: f32[2,8,8,128], index: 0, kind: input, shape index: {}]
  %s1 = inlined_call_operand.hbm [shape: f32[2,1,8,128], index: 1, kind: input, shape index: {}]
  %s2 = inlined_call_operand.hbm [shape: f32[2,1,8,128], index: 2, kind: input, shape index: {}]
  %s3 = inlined_call_operand.hbm [shape: f32[10,128], index: 3, kind: input, shape index: {}]
  %s4 = inlined_call_operand.hbm [shape: f32[2,8,8,128], index: 4, kind: output, shape index: {}]
  %s5 = sld [smem:[#allocation0]]
  $region65: #{tpu_custom_call.1} parent=0
    _
  %s7 = ssub.s32 1, %s5
  %s8 = scalar_select 0, %s7, %s5
  $region1: #{tpu_custom_call.1} parent=0
    #allocation2 [shape = 'u8[65536]{0}', space=vmem, size = 0x10000, scoped, tag = 'input window, operand 0']
    #allocation3 [shape = 's32[2]{0}', space=sflag, size = 0x8, scoped, tag = 'scoped memory for tpu_custom_call.1']
    #allocation4 [shape = 's32[2]{0}', space=sflag, size = 0x8, scoped, tag = 'scoped memory for tpu_custom_call.1']
    #allocation5 [shape = 'u8[8192]{0}', space=vmem, size = 0x2000, scoped, tag = 'input window, operand 1']
    #allocation6 [shape = 's32[2]{0}', space=sflag, size = 0x8, scoped, tag = 'scoped memory for tpu_custom_call.1']
    #allocation7 [shape = 'u8[8192]{0}', space=vmem, size = 0x2000, scoped, tag = 'input window, operand 2']
    #allocation8 [shape = 'u8[8192]{0}', space=vmem, size = 0x2000, scoped, tag = 'input window, operand 3, single buffered']
    #allocation9 [shape = 's32[1]{0}', space=sflag, size = 0x4, scoped, tag = 'scoped memory for tpu_custom_call.1']
    #allocation10 [shape = 'u8[65536]{0}', space=vmem, size = 0x10000, scoped, tag = 'output window, operand 0']
    %9 = vsyncpa [#allocation3], 0
    %s10 = scalar_lea.sflag [#allocation3], 1
    %11 = vsyncpa %s10, 0
    %12 = vsyncpa [#allocation6], 0
    %s13 = scalar_lea.sflag [#allocation6], 1
    %14 = vsyncpa %s13, 0
    %15 = vsyncpa [#allocation9], 0
    %16 = vsyncpa [#allocation4], 0
    %s17 = scalar_lea.sflag [#allocation4], 1
    %18 = vsyncpa %s17, 0
    loop: start=0, step=1, limit=4
    $region2: #{tpu_custom_call.1} parent=1 // loop_pre_header
      _
    $region3: #{tpu_custom_call.1} parent=1 // loop_header
      %s20 = sphi 0, %s24
      %p21 = scmp.ge.s32.totalorder %s20, 4
      %s27 = sphi 0, %s39
      %s28 = sphi 0, %s35
      %s29 = sphi 0, %s27
      %s30 = sphi 0, %s28
      %s31 = sphi 0, %s29
      %s32 = sphi 0, %s30
      %s44 = sphi 0, %s46
      %s47 = sphi 0, %s44
      %s48 = sphi 0, %s47
      %s64 = sphi 0, %s48
      %s72 = sphi 0, %s74
      %s75 = sphi 0, %s72
      %s76 = sphi 0, %s75
      %s92 = sphi 0, %s76
      %s100 = sphi 0, %s102
      %s103 = sphi 0, %s100
      %s104 = sphi 0, %s103
      %s120 = sphi 0, %s104
      %s124 = sphi 0, %s124
      %s126 = sphi 0, %s124
      %s127 = sphi 0, %s126
      %s141 = sphi 0, %s127
      %s149 = sphi 0, %s151
      %s152 = sphi 0, %s149
      %s153 = sphi 0, %s152
      %s169 = sphi 0, %s153
    $region4: #{tpu_custom_call.1} parent=1 // loop_header_branch
      %23 = sbr.rel (%p21) target = $region8
    $region5: #{tpu_custom_call.1} parent=1 // loop_body
      %s25 = ssub.s32 %s20, 1
      %s26 = ssub.s32 %s20, 2
      %s33 = sadd.s32 1, %s28
      %p34 = scmp.ge.s32.totalorder %s33, 1
      %s35 = scalar_select %p34, 0, %s33
      %s36 = sadd.s32 1, %s27
      %s37 = scalar_select %p34, %s36, %s27
      %p38 = scmp.ge.s32.totalorder %s37, 2
      %s39 = scalar_select %p38, 0, %s37
      %s40 = ssub.s32 %s27, %s39
      %s41 = ssub.s32 %s28, %s35
      %s42 = sor.u32 %s40, %s41
      %p43 = scmp.eq.s32.totalorder %s42, 0
      %s45 = sadd.s32 %s44, 1
      %s46 = scalar_select %p43, %s44, %s45
      %p49 = pneg %p43
      %p50 = scmp.eq.s32.totalorder %s20, 1
      %p51 = por %p49, %p50
      %p52 = scmp.ne.s32.totalorder %s44, %s47
      %p53 = scmp.eq.s32.totalorder %s20, 0
      %p54 = por %p52, %p53
      %p55 = scmp.ne.s32.totalorder %s44, %s47
      %p56 = scmp.eq.s32.totalorder %s25, 1
      %p57 = por %p55, %p56
      %p58 = scmp.ne.s32.totalorder %s47, %s48
      %p59 = scmp.eq.s32.totalorder %s25, 0
      %p60 = por %p58, %p59
      %p61 = scmp.ne.s32.totalorder %s47, %s48
      %p62 = scmp.eq.s32.totalorder %s26, 1
      %p63 = por %p61, %p62
      %p65 = scmp.ne.s32.totalorder %s48, %s64
      %p66 = scmp.eq.s32.totalorder %s26, 0
      %p67 = por %p65, %p66
      %s68 = ssub.s32 %s27, %s39
      %s69 = ssub.s32 %s28, %s35
      %s70 = sor.u32 %s68, %s69
      %p71 = scmp.eq.s32.totalorder %s70, 0
      %s73 = sadd.s32 %s72, 1
      %s74 = scalar_select %p71, %s72, %s73
      %p77 = pneg %p71
      %p78 = scmp.eq.s32.totalorder %s20, 1
      %p79 = por %p77, %p78
      %p80 = scmp.ne.s32.totalorder %s72, %s75
      %p81 = scmp.eq.s32.totalorder %s20, 0
      %p82 = por %p80, %p81
      %p83 = scmp.ne.s32.totalorder %s72, %s75
      %p84 = scmp.eq.s32.totalorder %s25, 1
      %p85 = por %p83, %p84
      %p86 = scmp.ne.s32.totalorder %s75, %s76
      %p87 = scmp.eq.s32.totalorder %s25, 0
      %p88 = por %p86, %p87
      %p89 = scmp.ne.s32.totalorder %s75, %s76
      %p90 = scmp.eq.s32.totalorder %s26, 1
      %p91 = por %p89, %p90
      %p93 = scmp.ne.s32.totalorder %s76, %s92
      %p94 = scmp.eq.s32.totalorder %s26, 0
      %p95 = por %p93, %p94
      %s96 = ssub.s32 %s27, %s39
      %s97 = ssub.s32 %s28, %s35
      %s98 = sor.u32 %s96, %s97
      %p99 = scmp.eq.s32.totalorder %s98, 0
      %s101 = sadd.s32 %s100, 1
      %s102 = scalar_select %p99, %s100, %s101
      %p105 = pneg %p99
      %p106 = scmp.eq.s32.totalorder %s20, 1
      %p107 = por %p105, %p106
      %p108 = scmp.ne.s32.totalorder %s100, %s103
      %p109 = scmp.eq.s32.totalorder %s20, 0
      %p110 = por %p108, %p109
      %p111 = scmp.ne.s32.totalorder %s100, %s103
      %p112 = scmp.eq.s32.totalorder %s25, 1
      %p113 = por %p111, %p112
      %p114 = scmp.ne.s32.totalorder %s103, %s104
      %p115 = scmp.eq.s32.totalorder %s25, 0
      %p116 = por %p114, %p115
      %p117 = scmp.ne.s32.totalorder %s103, %s104
      %p118 = scmp.eq.s32.totalorder %s26, 1
      %p119 = por %p117, %p118
      %p121 = scmp.ne.s32.totalorder %s104, %s120
      %p122 = scmp.eq.s32.totalorder %s26, 0
      %p123 = por %p121, %p122
      %s125 = sadd.s32 %s124, 1
      %p128 = scmp.eq.s32.totalorder %s20, 1
      %p129 = scmp.ne.s32.totalorder %s124, %s126
      %p130 = scmp.eq.s32.totalorder %s20, 0
      %p131 = por %p129, %p130
      %p132 = scmp.ne.s32.totalorder %s124, %s126
      %p133 = scmp.eq.s32.totalorder %s25, 1
      %p134 = por %p132, %p133
      %p135 = scmp.ne.s32.totalorder %s126, %s127
      %p136 = scmp.eq.s32.totalorder %s25, 0
      %p137 = por %p135, %p136
      %p138 = scmp.ne.s32.totalorder %s126, %s127
      %p139 = scmp.eq.s32.totalorder %s26, 1
      %p140 = por %p138, %p139
      %p142 = scmp.ne.s32.totalorder %s127, %s141
      %p143 = scmp.eq.s32.totalorder %s26, 0
      %p144 = por %p142, %p143
      %s145 = ssub.s32 %s27, %s39
      %s146 = ssub.s32 %s28, %s35
      %s147 = sor.u32 %s145, %s146
      %p148 = scmp.eq.s32.totalorder %s147, 0
      %s150 = sadd.s32 %s149, 1
      %s151 = scalar_select %p148, %s149, %s150
      %p154 = pneg %p148
      %p155 = scmp.eq.s32.totalorder %s20, 1
      %p156 = por %p154, %p155
      %p157 = scmp.ne.s32.totalorder %s149, %s152
      %p158 = scmp.eq.s32.totalorder %s20, 0
      %p159 = por %p157, %p158
      %p160 = scmp.ne.s32.totalorder %s149, %s152
      %p161 = scmp.eq.s32.totalorder %s25, 1
      %p162 = por %p160, %p161
      %p163 = scmp.ne.s32.totalorder %s152, %s153
      %p164 = scmp.eq.s32.totalorder %s25, 0
      %p165 = por %p163, %p164
      %p166 = scmp.ne.s32.totalorder %s152, %s153
      %p167 = scmp.eq.s32.totalorder %s26, 1
      %p168 = por %p166, %p167
      %p170 = scmp.ne.s32.totalorder %s153, %s169
      %p171 = scmp.eq.s32.totalorder %s26, 0
      %p172 = por %p170, %p171
      %p173 = scmp.le.s32.totalorder 1, %s20
      %p174 = scmp.lt.s32.totalorder %s20, 3
      %p175 = pnand %p173, %p174
      %p176 = pneg %p175
      // Predicated region
      $region9: #{tpu_custom_call.1} parent=5 // pred_check
        _
      $region10: #{tpu_custom_call.1} parent=5 // pred_check_branch
        %178 = sbr.rel (%p175) target = $region12
      $region11: #{tpu_custom_call.1} parent=5 // pred_region
        %s179 = ssub.s32 %s20, 1
        // Predicated region
        $region13: #{tpu_custom_call.1} parent=11 // pred_check
          %p180 = pneg %p137
        $region14: #{tpu_custom_call.1} parent=11 // pred_check_branch
          %182 = sbr.rel (%p180) target = $region16
        $region15: #{tpu_custom_call.1} parent=11 // pred_region
          %s184 = ssub.s32 256, 256
          %185 = vsyncadd [#allocation9], %s184
          %s186 = sshll.u32 [#allocation8], 4
          %s187 = int_to_ptr.vmem [resolvable:$true] %s186
          %192 = dma.hbm_to_vmem [thread:$0]  %s3, 256, %s187, [#allocation9], 128, 128, 8
        $region16: #{tpu_custom_call.1} parent=11 // pred_fallthru
          _
      $region12: #{tpu_custom_call.1} parent=5 // pred_fallthru
        _
      %p193 = scmp.lt.s32.totalorder %s20, 2
      // Predicated region
      $region17: #{tpu_custom_call.1} parent=5 // pred_check
        %p194 = pneg %p193
      $region18: #{tpu_custom_call.1} parent=5 // pred_check_branch
        %196 = sbr.rel (%p194) target = $region20
      $region19: #{tpu_custom_call.1} parent=5 // pred_region
        // Predicated region
        $region21: #{tpu_custom_call.1} parent=19 // pred_check
          %p197 = pneg %p54
        $region22: #{tpu_custom_call.1} parent=19 // pred_check_branch
          %199 = sbr.rel (%p197) target = $region24
        $region23: #{tpu_custom_call.1} parent=19 // pred_region
          %s200 = sand.u32 %s44, 1
          %s201 = scalar_lea.sflag [#allocation3], %s200
          %s202 = sand.u32 %s44, 1
          %s203 = smul.addr %s202, 64
          %s204 = scalar_lea.vmem [#allocation2], %s203
          %s205 = smul.u32 8, %s28
          %s207 = ssub.s32 1024, 1024
          %208 = vsyncadd %s201, %s207
          %s209 = smul.addr %s27, 8
          %s210 = sadd.s32 %s205, %s209
          %s211 = smul.addr %s210, 128
          %s212 = scalar_lea.hbm %s0, %s211
          %s213 = sshll.u32 %s204, 4
          %s214 = int_to_ptr.vmem [resolvable:$true] %s213
          %219 = dma.hbm_to_vmem [thread:$0]  %s212, 1024, %s214, %s201, 128, 128, 8
        $region24: #{tpu_custom_call.1} parent=19 // pred_fallthru
          _
        // Predicated region
        $region25: #{tpu_custom_call.1} parent=19 // pred_check
          %p220 = pneg %p82
        $region26: #{tpu_custom_call.1} parent=19 // pred_check_branch
          %222 = sbr.rel (%p220) target = $region28
        $region27: #{tpu_custom_call.1} parent=19 // pred_region
          %s223 = sand.u32 %s20, 1
          %s224 = scalar_lea.sflag [#allocation6], %s223
          %s225 = sand.u32 %s72, 1
          %s226 = smul.addr %s225, 8
          %s227 = scalar_lea.vmem [#allocation5], %s226
          %s229 = ssub.s32 128, 128
          %230 = vsyncadd %s224, %s229
          %s231 = sadd.s32 %s28, %s27
          %s232 = smul.addr %s231, 128
          %s233 = scalar_lea.hbm %s1, %s232
          %s235 = sshll.u32 %s227, 4
          %s236 = int_to_ptr.vmem [resolvable:$true] %s235
          %238 = dma.hbm_to_vmem [thread:$0]  %s233, 128, %s236, %s224
        $region28: #{tpu_custom_call.1} parent=19 // pred_fallthru
          _
        // Predicated region
        $region29: #{tpu_custom_call.1} parent=19 // pred_check
          %p239 = pneg %p110
        $region30: #{tpu_custom_call.1} parent=19 // pred_check_branch
          %241 = sbr.rel (%p239) target = $region32
        $region31: #{tpu_custom_call.1} parent=19 // pred_region
          %s242 = sand.u32 %s20, 1
          %s243 = scalar_lea.sflag [#allocation6], %s242
          %s244 = sand.u32 %s100, 1
          %s245 = smul.addr %s244, 8
          %s246 = scalar_lea.vmem [#allocation7], %s245
          %s248 = ssub.s32 128, 128
          %249 = vsyncadd %s243, %s248
          %s250 = sadd.s32 %s28, %s27
          %s251 = smul.addr %s250, 128
          %s252 = scalar_lea.hbm %s2, %s251
          %s254 = sshll.u32 %s246, 4
          %s255 = int_to_ptr.vmem [resolvable:$true] %s254
          %257 = dma.hbm_to_vmem [thread:$0]  %s252, 128, %s255, %s243
        $region32: #{tpu_custom_call.1} parent=19 // pred_fallthru
          _
      $region20: #{tpu_custom_call.1} parent=5 // pred_fallthru
        _
      %p258 = scmp.le.s32.totalorder 1, %s20
      %p259 = scmp.lt.s32.totalorder %s20, 3
      %p260 = pnand %p258, %p259
      %p261 = pneg %p260
      // Predicated region
      $region33: #{tpu_custom_call.1} parent=5 // pred_check
        _
      $region34: #{tpu_custom_call.1} parent=5 // pred_check_branch
        %263 = sbr.rel (%p260) target = $region36
      $region35: #{tpu_custom_call.1} parent=5 // pred_region
        %s264 = ssub.s32 %s20, 1
        %s265 = sand.u32 %s47, 1
        %s266 = scalar_lea.sflag [#allocation3], %s265
        %s267 = sand.u32 %s47, 1
        %s268 = smul.addr %s267, 64
        %s269 = scalar_lea.vmem [#allocation2], %s268
        // Predicated region
        $region37: #{tpu_custom_call.1} parent=35 // pred_check
          %p270 = pneg %p60
        $region38: #{tpu_custom_call.1} parent=35 // pred_check_branch
          %272 = sbr.rel (%p270) target = $region40
        $region39: #{tpu_custom_call.1} parent=35 // pred_region
          %273 = dma.done %s266, 1024
        $region40: #{tpu_custom_call.1} parent=35 // pred_fallthru
          _
        %s274 = sand.u32 %s25, 1
        %s275 = scalar_lea.sflag [#allocation6], %s274
        %s276 = sand.u32 %s75, 1
        %s277 = smul.addr %s276, 8
        %s278 = scalar_lea.vmem [#allocation5], %s277
        // Predicated region
        $region41: #{tpu_custom_call.1} parent=35 // pred_check
          %p279 = pneg %p88
        $region42: #{tpu_custom_call.1} parent=35 // pred_check_branch
          %281 = sbr.rel (%p279) target = $region44
        $region43: #{tpu_custom_call.1} parent=35 // pred_region
          %282 = dma.done %s275, 128
        $region44: #{tpu_custom_call.1} parent=35 // pred_fallthru
          _
        %s283 = sand.u32 %s25, 1
        %s284 = scalar_lea.sflag [#allocation6], %s283
        %s285 = sand.u32 %s103, 1
        %s286 = smul.addr %s285, 8
        %s287 = scalar_lea.vmem [#allocation7], %s286
        // Predicated region
        $region45: #{tpu_custom_call.1} parent=35 // pred_check
          %p288 = pneg %p116
        $region46: #{tpu_custom_call.1} parent=35 // pred_check_branch
          %290 = sbr.rel (%p288) target = $region48
        $region47: #{tpu_custom_call.1} parent=35 // pred_region
          %291 = dma.done %s284, 128
        $region48: #{tpu_custom_call.1} parent=35 // pred_fallthru
          _
        // Predicated region
        $region49: #{tpu_custom_call.1} parent=35 // pred_check
          %p292 = pneg %p137
        $region50: #{tpu_custom_call.1} parent=35 // pred_check_branch
          %294 = sbr.rel (%p292) target = $region52
        $region51: #{tpu_custom_call.1} parent=35 // pred_region
          %295 = dma.done [#allocation9], 256
        $region52: #{tpu_custom_call.1} parent=35 // pred_fallthru
          _
        %s296 = sand.u32 %s47, 1
        %s297 = scalar_lea.sflag [#allocation3], %s296
        %s298 = sand.u32 %s47, 1
        %s299 = smul.addr %s298, 64
        %s300 = scalar_lea.vmem [#allocation2], %s299
        %p301 = pneg %p60
        %p302 = pneg %p57
        %s303 = sand.u32 %s25, 1
        %s304 = scalar_lea.sflag [#allocation6], %s303
        %s305 = sand.u32 %s75, 1
        %s306 = smul.addr %s305, 8
        %s307 = scalar_lea.vmem [#allocation5], %s306
        %p308 = pneg %p88
        %p309 = pneg %p85
        %s310 = sand.u32 %s25, 1
        %s311 = scalar_lea.sflag [#allocation6], %s310
        %s312 = sand.u32 %s103, 1
        %s313 = smul.addr %s312, 8
        %s314 = scalar_lea.vmem [#allocation7], %s313
        %p315 = pneg %p116
        %p316 = pneg %p113
        %p317 = pneg %p137
        %p318 = pneg %p134
        %p319 = pneg %p165
        %p320 = pneg %p162
        %s321 = sand.u32 %s152, 1
        %s322 = scalar_lea.sflag [#allocation4], %s321
        %s323 = sand.u32 %s152, 1
        %s324 = smul.addr %s323, 64
        %s325 = scalar_lea.vmem [#allocation10], %s324
        %s326 = smul.u32 8, %s30
        %s327 = smul.u32 8, %s30
        %v328 = vld [vmem:[%s278] sm:$0xff]
        %v329 = vld [vmem:[%s269] sm:$0xff]
        %v330 = vld [vmem:[%s269 + $0x8] sm:$0xff]
        %v331 = vld [vmem:[%s269 + $0x10] sm:$0xff]
        %v332 = vld [vmem:[%s269 + $0x18] sm:$0xff]
        %v333 = vld [vmem:[%s269 + $0x20] sm:$0xff]
        %v334 = vld [vmem:[%s269 + $0x28] sm:$0xff]
        %v335 = vld [vmem:[%s269 + $0x30] sm:$0xff]
        %v336 = vld [vmem:[%s269 + $0x38] sm:$0xff]
        %v337 = vld [vmem:[%s287] sm:$0xff]
        %v338 = vlaneseq
        %v339 = vshrl.u32 %v338, 7
        %vm340 = vcmp.ge.s32.totalorder %v339, 1
        %v341 = vrot.slane %v328, 7
        %v342 = vrot.slane %v329, 7
        %v343 = vrot.slane %v330, 7
        %v344 = vrot.slane %v331, 7
        %v345 = vrot.slane %v332, 7
        %v346 = vrot.slane %v333, 7
        %v347 = vrot.slane %v334, 7
        %v348 = vrot.slane %v335, 7
        %v349 = vrot.slane %v336, 7
        %v350 = vrot.slane %v337, 7
        %v351 = vsel %vm340, 1, 0
        %vm352 = vcmp.eq.s32.totalorder %v351, 1
        %v353 = vsel %vm352, %v341, 0.0
        %v354 = vsel %vm352, %v342, 0.0
        %v355 = vsel %vm352, %v343, 0.0
        %v356 = vsel %vm352, %v344, 0.0
        %v357 = vsel %vm352, %v345, 0.0
        %v358 = vsel %vm352, %v346, 0.0
        %v359 = vsel %vm352, %v347, 0.0
        %v360 = vsel %vm352, %v348, 0.0
        %v361 = vsel %vm352, %v349, 0.0
        %v362 = vsel %vm352, %v350, 0.0
        %vm363 = vcmp.le.s32.totalorder %v339, 6
        %v364 = vrot.slane %v328, 1
        %v365 = vrot.slane %v329, 1
        %v366 = vrot.slane %v330, 1
        %v367 = vrot.slane %v331, 1
        %v368 = vrot.slane %v332, 1
        %v369 = vrot.slane %v333, 1
        %v370 = vrot.slane %v334, 1
        %v371 = vrot.slane %v335, 1
        %v372 = vrot.slane %v336, 1
        %v373 = vrot.slane %v337, 1
        %v374 = vsel %vm363, 1, 0
        %vm375 = vcmp.eq.s32.totalorder %v374, 1
        %v376 = vsel %vm375, %v364, 0.0
        %v377 = vsel %vm375, %v365, 0.0
        %v378 = vsel %vm375, %v366, 0.0
        %v379 = vsel %vm375, %v367, 0.0
        %v380 = vsel %vm375, %v368, 0.0
        %v381 = vsel %vm375, %v369, 0.0
        %v382 = vsel %vm375, %v370, 0.0
        %v383 = vsel %vm375, %v371, 0.0
        %v384 = vsel %vm375, %v372, 0.0
        %v385 = vsel %vm375, %v373, 0.0
        %v386 = vld [vmem:[#allocation8] sm:$0xff]
        %v387 = vld [vmem:[#allocation8 + $0x8] sm:$0x3]
        %v388 = vlaneseq
        %v389 = vshrl.u32 %v388, 7
        %v390 = vsub.s32 0, %v389
        %v391 = vrot.slane %v386, %v390
        %v392 = vmul.f32 %v353, %v391
        %v393 = vmul.f32 %v354, %v391
        %v394 = vmul.f32 %v355, %v391
        %v395 = vmul.f32 %v356, %v391
        %v396 = vmul.f32 %v357, %v391
        %v397 = vmul.f32 %v358, %v391
        %v398 = vmul.f32 %v359, %v391
        %v399 = vmul.f32 %v360, %v391
        %v400 = vlaneseq
        %v401 = vshrl.u32 %v400, 7
        %v402 = vsub.s32 1, %v401
        %v403 = vrot.slane %v386, %v402
        %v404 = vmul.f32 %v328, %v403
        %v405 = vmul.f32 %v329, %v403
        %v406 = vmul.f32 %v330, %v403
        %v407 = vmul.f32 %v331, %v403
        %v408 = vmul.f32 %v332, %v403
        %v409 = vmul.f32 %v333, %v403
        %v410 = vmul.f32 %v334, %v403
        %v411 = vmul.f32 %v335, %v403
        %v412 = vadd.f32 %v392, %v404
        %v413 = vadd.f32 %v393, %v405
        %v414 = vadd.f32 %v394, %v406
        %v415 = vadd.f32 %v395, %v407
        %v416 = vadd.f32 %v396, %v408
        %v417 = vadd.f32 %v397, %v409
        %v418 = vadd.f32 %v398, %v410
        %v419 = vadd.f32 %v399, %v411
        %v420 = vlaneseq
        %v421 = vshrl.u32 %v420, 7
        %v422 = vsub.s32 2, %v421
        %v423 = vrot.slane %v386, %v422
        %v424 = vmul.f32 %v376, %v423
        %v425 = vmul.f32 %v377, %v423
        %v426 = vmul.f32 %v378, %v423
        %v427 = vmul.f32 %v379, %v423
        %v428 = vmul.f32 %v380, %v423
        %v429 = vmul.f32 %v381, %v423
        %v430 = vmul.f32 %v382, %v423
        %v431 = vmul.f32 %v383, %v423
        %v432 = vadd.f32 %v412, %v424
        %v433 = vadd.f32 %v413, %v425
        %v434 = vadd.f32 %v414, %v426
        %v435 = vadd.f32 %v415, %v427
        %v436 = vadd.f32 %v416, %v428
        %v437 = vadd.f32 %v417, %v429
        %v438 = vadd.f32 %v418, %v430
        %v439 = vadd.f32 %v419, %v431
        %v440 = vlaneseq
        %v441 = vshrl.u32 %v440, 7
        %v442 = vsub.s32 3, %v441
        %v443 = vrot.slane %v386, %v442
        %v444 = vmul.f32 %v354, %v443
        %v445 = vmul.f32 %v355, %v443
        %v446 = vmul.f32 %v356, %v443
        %v447 = vmul.f32 %v357, %v443
        %v448 = vmul.f32 %v358, %v443
        %v449 = vmul.f32 %v359, %v443
        %v450 = vmul.f32 %v360, %v443
        %v451 = vmul.f32 %v361, %v443
        %v452 = vadd.f32 %v432, %v444
        %v453 = vadd.f32 %v433, %v445
        %v454 = vadd.f32 %v434, %v446
        %v455 = vadd.f32 %v435, %v447
        %v456 = vadd.f32 %v436, %v448
        %v457 = vadd.f32 %v437, %v449
        %v458 = vadd.f32 %v438, %v450
        %v459 = vadd.f32 %v439, %v451
        %v460 = vlaneseq
        %v461 = vshrl.u32 %v460, 7
        %v462 = vsub.s32 4, %v461
        %v463 = vrot.slane %v386, %v462
        %v464 = vmul.f32 %v329, %v463
        %v465 = vmul.f32 %v330, %v463
        %v466 = vmul.f32 %v331, %v463
        %v467 = vmul.f32 %v332, %v463
        %v468 = vmul.f32 %v333, %v463
        %v469 = vmul.f32 %v334, %v463
        %v470 = vmul.f32 %v335, %v463
        %v471 = vmul.f32 %v336, %v463
        %v472 = vadd.f32 %v452, %v464
        %v473 = vadd.f32 %v453, %v465
        %v474 = vadd.f32 %v454, %v466
        %v475 = vadd.f32 %v455, %v467
        %v476 = vadd.f32 %v456, %v468
        %v477 = vadd.f32 %v457, %v469
        %v478 = vadd.f32 %v458, %v470
        %v479 = vadd.f32 %v459, %v471
        %v480 = vlaneseq
        %v481 = vshrl.u32 %v480, 7
        %v482 = vsub.s32 5, %v481
        %v483 = vrot.slane %v386, %v482
        %v484 = vmul.f32 %v377, %v483
        %v485 = vmul.f32 %v378, %v483
        %v486 = vmul.f32 %v379, %v483
        %v487 = vmul.f32 %v380, %v483
        %v488 = vmul.f32 %v381, %v483
        %v489 = vmul.f32 %v382, %v483
        %v490 = vmul.f32 %v383, %v483
        %v491 = vmul.f32 %v384, %v483
        %v492 = vadd.f32 %v472, %v484
        %v493 = vadd.f32 %v473, %v485
        %v494 = vadd.f32 %v474, %v486
        %v495 = vadd.f32 %v475, %v487
        %v496 = vadd.f32 %v476, %v488
        %v497 = vadd.f32 %v477, %v489
        %v498 = vadd.f32 %v478, %v490
        %v499 = vadd.f32 %v479, %v491
        %v500 = vlaneseq
        %v501 = vshrl.u32 %v500, 7
        %v502 = vsub.s32 6, %v501
        %v503 = vrot.slane %v386, %v502
        %v504 = vmul.f32 %v355, %v503
        %v505 = vmul.f32 %v356, %v503
        %v506 = vmul.f32 %v357, %v503
        %v507 = vmul.f32 %v358, %v503
        %v508 = vmul.f32 %v359, %v503
        %v509 = vmul.f32 %v360, %v503
        %v510 = vmul.f32 %v361, %v503
        %v511 = vmul.f32 %v362, %v503
        %v512 = vadd.f32 %v492, %v504
        %v513 = vadd.f32 %v493, %v505
        %v514 = vadd.f32 %v494, %v506
        %v515 = vadd.f32 %v495, %v507
        %v516 = vadd.f32 %v496, %v508
        %v517 = vadd.f32 %v497, %v509
        %v518 = vadd.f32 %v498, %v510
        %v519 = vadd.f32 %v499, %v511
        %v520 = vlaneseq
        %v521 = vshrl.u32 %v520, 7
        %v522 = vsub.s32 7, %v521
        %v523 = vrot.slane %v386, %v522
        %v524 = vmul.f32 %v330, %v523
        %v525 = vmul.f32 %v331, %v523
        %v526 = vmul.f32 %v332, %v523
        %v527 = vmul.f32 %v333, %v523
        %v528 = vmul.f32 %v334, %v523
        %v529 = vmul.f32 %v335, %v523
        %v530 = vmul.f32 %v336, %v523
        %v531 = vmul.f32 %v337, %v523
        %v532 = vadd.f32 %v512, %v524
        %v533 = vadd.f32 %v513, %v525
        %v534 = vadd.f32 %v514, %v526
        %v535 = vadd.f32 %v515, %v527
        %v536 = vadd.f32 %v516, %v528
        %v537 = vadd.f32 %v517, %v529
        %v538 = vadd.f32 %v518, %v530
        %v539 = vadd.f32 %v519, %v531
        %v540 = vlaneseq
        %v541 = vshrl.u32 %v540, 7
        %v542 = vsub.s32 0, %v541
        %v543 = vrot.slane %v387, %v542
        %v544 = vmul.f32 %v378, %v543
        %v545 = vmul.f32 %v379, %v543
        %v546 = vmul.f32 %v380, %v543
        %v547 = vmul.f32 %v381, %v543
        %v548 = vmul.f32 %v382, %v543
        %v549 = vmul.f32 %v383, %v543
        %v550 = vmul.f32 %v384, %v543
        %v551 = vmul.f32 %v385, %v543
        %v552 = vadd.f32 %v532, %v544
        %v553 = vadd.f32 %v533, %v545
        %v554 = vadd.f32 %v534, %v546
        %v555 = vadd.f32 %v535, %v547
        %v556 = vadd.f32 %v536, %v548
        %v557 = vadd.f32 %v537, %v549
        %v558 = vadd.f32 %v538, %v550
        %v559 = vadd.f32 %v539, %v551
        %v560 = vlaneseq
        %v561 = vshrl.u32 %v560, 7
        %v562 = vsub.s32 1, %v561
        %v563 = vrot.slane %v387, %v562
        %v564 = vadd.f32 %v552, %v563
        %v565 = vadd.f32 %v553, %v563
        %v566 = vadd.f32 %v554, %v563
        %v567 = vadd.f32 %v555, %v563
        %v568 = vadd.f32 %v556, %v563
        %v569 = vadd.f32 %v557, %v563
        %v570 = vadd.f32 %v558, %v563
        %v571 = vadd.f32 %v559, %v563
        %v572 = vmax.f32 %v564, 0.0
        %v573 = vmax.f32 %v565, 0.0
        %v574 = vmax.f32 %v566, 0.0
        %v575 = vmax.f32 %v567, 0.0
        %v576 = vmax.f32 %v568, 0.0
        %v577 = vmax.f32 %v569, 0.0
        %v578 = vmax.f32 %v570, 0.0
        %v579 = vmax.f32 %v571, 0.0
        %580 = vst [vmem:[%s325] sm:$0xff] %v572
        %581 = vst [vmem:[%s325 + $0x8] sm:$0xff] %v573
        %582 = vst [vmem:[%s325 + $0x10] sm:$0xff] %v574
        %583 = vst [vmem:[%s325 + $0x18] sm:$0xff] %v575
        %584 = vst [vmem:[%s325 + $0x20] sm:$0xff] %v576
        %585 = vst [vmem:[%s325 + $0x28] sm:$0xff] %v577
        %586 = vst [vmem:[%s325 + $0x30] sm:$0xff] %v578
        %587 = vst [vmem:[%s325 + $0x38] sm:$0xff] %v579
        %s588 = sand.u32 %s152, 1
        %s589 = scalar_lea.sflag [#allocation4], %s588
        %s590 = sand.u32 %s152, 1
        %s591 = smul.addr %s590, 64
        %s592 = scalar_lea.vmem [#allocation10], %s591
        // Predicated region
        $region53: #{tpu_custom_call.1} parent=35 // pred_check
          %p593 = pneg %p162
        $region54: #{tpu_custom_call.1} parent=35 // pred_check_branch
          %595 = sbr.rel (%p593) target = $region56
        $region55: #{tpu_custom_call.1} parent=35 // pred_region
          %s596 = smul.u32 8, %s30
          %s598 = ssub.s32 1024, 1024
          %599 = vsyncadd %s589, %s598
          %s600 = smul.addr %s29, 8
          %s601 = sadd.s32 %s596, %s600
          %s602 = smul.addr %s601, 128
          %s603 = scalar_lea.hbm %s4, %s602
          %s604 = sshll.u32 %s592, 4
          %s605 = int_to_ptr.vmem [resolvable:$true] %s604
          %610 = dma.vmem_to_hbm [thread:$0]  %s605, 1024, %s603, %s589, 128, 128, 8
        $region56: #{tpu_custom_call.1} parent=35 // pred_fallthru
          _
      $region36: #{tpu_custom_call.1} parent=5 // pred_fallthru
        _
      %p611 = scmp.le.s32.totalorder 2, %s20
      // Predicated region
      $region57: #{tpu_custom_call.1} parent=5 // pred_check
        %p612 = pneg %p611
      $region58: #{tpu_custom_call.1} parent=5 // pred_check_branch
        %614 = sbr.rel (%p612) target = $region60
      $region59: #{tpu_custom_call.1} parent=5 // pred_region
        %s615 = ssub.s32 %s20, 2
        // Predicated region
        $region61: #{tpu_custom_call.1} parent=59 // pred_check
          %p616 = pneg %p168
        $region62: #{tpu_custom_call.1} parent=59 // pred_check_branch
          %618 = sbr.rel (%p616) target = $region64
        $region63: #{tpu_custom_call.1} parent=59 // pred_region
          %s619 = sand.u32 %s153, 1
          %s620 = scalar_lea.sflag [#allocation4], %s619
          %s621 = sand.u32 %s153, 1
          %s622 = smul.addr %s621, 64
          %s623 = scalar_lea.vmem [#allocation10], %s622
          %624 = dma.done %s620, 1024
        $region64: #{tpu_custom_call.1} parent=59 // pred_fallthru
          _
      $region60: #{tpu_custom_call.1} parent=5 // pred_fallthru
        _
    $region6: #{tpu_custom_call.1} parent=1 // loop_footer
      %s24 = sadd.s32 1, %s20
    $region7: #{tpu_custom_call.1} parent=1 // loop_footer_branch
      %19 = sbr.rel target = $region3
    $region8: #{tpu_custom_call.1} parent=1 // loop_exit
      _
    %625 = vsyncpa [#allocation3], 1
    %s626 = scalar_lea.sflag [#allocation3], 1
    %627 = vsyncpa %s626, 1
    %628 = vsyncpa [#allocation6], 1
    %s629 = scalar_lea.sflag [#allocation6], 1
    %630 = vsyncpa %s629, 1
    %631 = vsyncpa [#allocation9], 1
    %632 = vsyncpa [#allocation4], 1
    %s633 = scalar_lea.sflag [#allocation4], 1
    %634 = vsyncpa %s633, 1

</llo_original>
